<compile_context>
chip_gen: v5e
topology: v5e:2x2
jax: 0.10.0
libtpu: 0.0.40
codegen_flags: <defaults>
</compile_context>

<pallas_src>
import jax
import jax.numpy as jnp
import numpy as np
from jax.experimental import pallas as pl
from jax.experimental.pallas import tpu as pltpu

SIGMA_DATA = 0.5  # EDM scaling sigma_data


def _denoiser_dub_kernel(cskip_ref, cout_ref, cin_ref, w_ref, bias_ref,
                         x_ref, m_ref, g_ref, o_ref):
    # grid = (B, T//tn); per-batch coefficients indexed by the B coordinate.
    b = pl.program_id(0)
    c_skip = cskip_ref[b]
    c_out = cout_ref[b]
    c_in = cin_ref[b]

    C = x_ref.shape[1]           # channels (small, static)

    # Load per-channel (tn, HW) tiles once; reuse for both mask blends.
    m = [m_ref[0, c] for c in range(C)]
    g = [g_ref[0, c] for c in range(C)]
    # mask_input:  x*m + g*(1-m)  ==  g + (x - g)*m
    xm = [g[c] + (x_ref[0, c] - g[c]) * m[c] for c in range(C)]

    # Synthetic network on the VPU: 1x1 conv unrolled over channels with
    # c_in folded into the scalar weights, plus the precombined bias.
    for co in range(C):
        acc = xm[0] * (w_ref[co, 0] * c_in)
        for ci in range(1, C):
            acc = acc + xm[ci] * (w_ref[co, ci] * c_in)
        acc = acc + bias_ref[b, co]
        # out = net_out * c_out + input * c_skip, then final mask blend.
        out_c = acc * c_out + xm[co] * c_skip
        out_c = g[co] + (out_c - g[co]) * m[co]
        # Output block layout is (1, tn, C, HW): write channel co directly,
        # so the (b t) c h w permutation never touches HBM twice.
        o_ref[0, :, co, :] = out_c


def _pick_t_tile(T, bytes_per_frame, budget_bytes):
    """Largest legal T-tile: full T if it fits the per-stream budget, else a
    multiple-of-8 divisor of T (keeps the (8,128) block rule)."""
    if T * bytes_per_frame <= budget_bytes:
        return T
    best = None
    for tn in range(8, T, 8):
        if T % tn == 0 and tn * bytes_per_frame <= budget_bytes:
            best = tn
    # TODO(synk): if T has no multiple-of-8 divisor under budget, fall back to
    # the full T block (always layout-legal, just a larger VMEM footprint).
    return best if best is not None else T


def denoiser_dub_forward(x, sigma, gt, masks, W, b, nemb):
    """x, gt, masks: (B, C, T, H, W) f32; sigma: (B,) f32; W: (C, C);
    b, nemb: (C,).  Returns (B*T, C, H, W), like the PyTorch forward."""
    B, C, T, H, Wd = x.shape
    HW = H * Wd

    # Free, contiguous reshapes (no data movement).
    xf = x.reshape(B, C, T, HW)
    gf = gt.reshape(B, C, T, HW)
    mf = masks.reshape(B, C, T, HW)

    # EDM scaling, computed once per batch element (sigma broadcast over T).
    sd2 = jnp.float32(SIGMA_DATA * SIGMA_DATA)
    sig = sigma.astype(jnp.float32)
    den = sig * sig + sd2
    inv_sqrt = jax.lax.rsqrt(den)
    c_skip = sd2 / den                       # (B,)
    c_out = sig * SIGMA_DATA * inv_sqrt      # (B,)
    c_in = inv_sqrt                          # (B,)
    c_noise = 0.25 * jnp.log(sig)            # (B,)  (sigma > 0 for EDM)
    # Combined per-batch bias of the synthetic network: b + c_noise * nemb.
    bias = b.astype(jnp.float32)[None, :] + c_noise[:, None] * nemb[None, :]

    # Block sizing: target ~2 MiB per input stream block; full-T block when
    # it fits (typical latent-video shapes land right in the sweet spot).
    tn = _pick_t_tile(T, C * HW * 4, 2 << 20)
    nt = T // tn
    block_bytes = C * tn * HW * 4
    # 4 streams (x, masks, gt, out) x double-buffering + scratch headroom;
    # clamp to v7x's 64 MiB physical VMEM.
    vmem_limit = int(min(max(8 * block_bytes + (8 << 20), 32 << 20), 64 << 20))

    in_tile = pl.BlockSpec((1, C, tn, HW), lambda bb, ti: (bb, 0, ti, 0))
    smem = pl.BlockSpec(memory_space=pltpu.MemorySpace.SMEM)

    out = pl.pallas_call(
        _denoiser_dub_kernel,
        out_shape=jax.ShapeDtypeStruct((B, T, C, HW), jnp.float32),
        grid=(B, nt),
        in_specs=[
            smem,      # c_skip (B,)
            smem,      # c_out  (B,)
            smem,      # c_in   (B,)
            smem,      # conv weight (C, C)
            smem,      # combined bias (B, C)
            in_tile,   # input  (B, C, T, HW)
            in_tile,   # masks
            in_tile,   # gt
        ],
        out_specs=pl.BlockSpec((1, tn, C, HW), lambda bb, ti: (bb, ti, 0, 0)),
        compiler_params=pltpu.CompilerParams(
            dimension_semantics=("parallel", "parallel"),
            vmem_limit_bytes=vmem_limit),
    )(c_skip, c_out, c_in, W.astype(jnp.float32), bias, xf, mf, gf)

    # Free reshape: (B, T, C, HW) is already the '(b t) c h w' memory order.
    return out.reshape(B * T, C, H, Wd)


def denoiser_dub_reference(x, sigma, gt, masks, W, b, nemb):
    B, C, T, H, Wd = x.shape
    N = B * T
    flat = lambda a: jnp.transpose(a, (0, 2, 1, 3, 4)).reshape(N, C, H, Wd)
    xi, g, m = flat(x), flat(gt), flat(masks)
    sig = jnp.repeat(sigma, T)[:, None, None, None]
    sd2 = SIGMA_DATA ** 2
    den = sig ** 2 + sd2
    c_skip = sd2 / den
    c_out = sig * SIGMA_DATA / jnp.sqrt(den)
    c_in = 1.0 / jnp.sqrt(den)
    c_noise = 0.25 * jnp.log(sig)
    x_m = xi * m + g * (1.0 - m)
    net_in = x_m * c_in
    y = jnp.einsum('oc,nchw->nohw', W, net_in)
    y = y + b.reshape(1, C, 1, 1) + c_noise * nemb.reshape(1, C, 1, 1)
    out = y * c_out + x_m * c_skip
    out = out * m + g * (1.0 - m)
    return out


if __name__ == "__main__":
    key = jax.random.PRNGKey(0)
    kx, ks, kg, km, kw, kb, kn = jax.random.split(key, 7)

    B, C, T, H, Wd = 2, 4, 2, 16, 16   # input (b c t h w), 5-D path
    x = jax.random.normal(kx, (B, C, T, H, Wd), dtype=jnp.float32)
    gt = jax.random.normal(kg, (B, C, T, H, Wd), dtype=jnp.float32)
    masks = (jax.random.uniform(km, (B, C, T, H, Wd)) > 0.5).astype(jnp.float32)
    sigma = jax.random.uniform(ks, (B,), minval=0.1, maxval=2.0,
                               dtype=jnp.float32)

    # deterministic synthetic network params (1x1 conv + noise embedding)
    W = 0.1 * jax.random.normal(kw, (C, C), dtype=jnp.float32)
    b = 0.1 * jax.random.normal(kb, (C,), dtype=jnp.float32)
    nemb = 0.1 * jax.random.normal(kn, (C,), dtype=jnp.float32)

    out = denoiser_dub_forward(x, sigma, gt, masks, W, b, nemb)
    out = jax.block_until_ready(out)

    ref = denoiser_dub_reference(x, sigma, gt, masks, W, b, nemb)
    np.testing.assert_allclose(np.asarray(out), np.asarray(ref),
                               rtol=1e-5, atol=1e-5)
    print("KERNEL_OK")
</pallas_src>

<mosaic_0001>
module attributes {stable_mosaic.version = 11 : i64} {
  func.func @_denoiser_dub_kernel(%arg0: i32, %arg1: i32, %arg2: memref<2xf32, #tpu.memory_space<smem>>, %arg3: memref<2xf32, #tpu.memory_space<smem>>, %arg4: memref<2xf32, #tpu.memory_space<smem>>, %arg5: memref<4x4xf32, #tpu.memory_space<smem>>, %arg6: memref<2x4xf32, #tpu.memory_space<smem>>, %arg7: memref<1x4x2x256xf32, #tpu.memory_space<vmem>>, %arg8: memref<1x4x2x256xf32, #tpu.memory_space<vmem>>, %arg9: memref<1x4x2x256xf32, #tpu.memory_space<vmem>>, %arg10: memref<1x2x4x256xf32, #tpu.memory_space<vmem>>) attributes {dimension_semantics = [#tpu.dimension_semantics<parallel>, #tpu.dimension_semantics<parallel>], iteration_bounds = array<i64: 2, 1>, scalar_prefetch = 0 : i64, scratch_operands = 0 : i64, tpu.core_type = #tpu.core_type<tc>, window_params = [{transform_indices = @transform_0, window_bounds = array<i64: 2>}, {transform_indices = @transform_1, window_bounds = array<i64: 2>}, {transform_indices = @transform_2, window_bounds = array<i64: 2>}, {transform_indices = @transform_3, window_bounds = array<i64: 4, 4>}, {transform_indices = @transform_4, window_bounds = array<i64: 2, 4>}, {transform_indices = @transform_5, window_bounds = array<i64: 1, 4, 2, 256>}, {transform_indices = @transform_6, window_bounds = array<i64: 1, 4, 2, 256>}, {transform_indices = @transform_7, window_bounds = array<i64: 1, 4, 2, 256>}, {transform_indices = @transform_8, window_bounds = array<i64: 1, 2, 4, 256>}]} {
    %0 = arith.index_cast %arg0 : i32 to index
    %1 = memref.load %arg2[%0] : memref<2xf32, #tpu.memory_space<smem>>
    %2 = arith.index_cast %arg0 : i32 to index
    %3 = memref.load %arg3[%2] : memref<2xf32, #tpu.memory_space<smem>>
    %4 = arith.index_cast %arg0 : i32 to index
    %5 = memref.load %arg4[%4] : memref<2xf32, #tpu.memory_space<smem>>
    %c0 = arith.constant 0 : index
    %c0_0 = arith.constant 0 : index
    %c0_1 = arith.constant 0 : index
    %c0_2 = arith.constant 0 : index
    %6 = vector.load %arg8[%c0, %c0_0, %c0_1, %c0_2] : memref<1x4x2x256xf32, #tpu.memory_space<vmem>>, vector<1x1x2x256xf32>
    %7 = vector.shape_cast %6 : vector<1x1x2x256xf32> to vector<2x256xf32>
    %c0_3 = arith.constant 0 : index
    %c1 = arith.constant 1 : index
    %c0_4 = arith.constant 0 : index
    %c0_5 = arith.constant 0 : index
    %8 = vector.load %arg8[%c0_3, %c1, %c0_4, %c0_5] : memref<1x4x2x256xf32, #tpu.memory_space<vmem>>, vector<1x1x2x256xf32>
    %9 = vector.shape_cast %8 : vector<1x1x2x256xf32> to vector<2x256xf32>
    %c0_6 = arith.constant 0 : index
    %c2 = arith.constant 2 : index
    %c0_7 = arith.constant 0 : index
    %c0_8 = arith.constant 0 : index
    %10 = vector.load %arg8[%c0_6, %c2, %c0_7, %c0_8] : memref<1x4x2x256xf32, #tpu.memory_space<vmem>>, vector<1x1x2x256xf32>
    %11 = vector.shape_cast %10 : vector<1x1x2x256xf32> to vector<2x256xf32>
    %c0_9 = arith.constant 0 : index
    %c3 = arith.constant 3 : index
    %c0_10 = arith.constant 0 : index
    %c0_11 = arith.constant 0 : index
    %12 = vector.load %arg8[%c0_9, %c3, %c0_10, %c0_11] : memref<1x4x2x256xf32, #tpu.memory_space<vmem>>, vector<1x1x2x256xf32>
    %13 = vector.shape_cast %12 : vector<1x1x2x256xf32> to vector<2x256xf32>
    %c0_12 = arith.constant 0 : index
    %c0_13 = arith.constant 0 : index
    %c0_14 = arith.constant 0 : index
    %c0_15 = arith.constant 0 : index
    %14 = vector.load %arg9[%c0_12, %c0_13, %c0_14, %c0_15] : memref<1x4x2x256xf32, #tpu.memory_space<vmem>>, vector<1x1x2x256xf32>
    %15 = vector.shape_cast %14 : vector<1x1x2x256xf32> to vector<2x256xf32>
    %c0_16 = arith.constant 0 : index
    %c1_17 = arith.constant 1 : index
    %c0_18 = arith.constant 0 : index
    %c0_19 = arith.constant 0 : index
    %16 = vector.load %arg9[%c0_16, %c1_17, %c0_18, %c0_19] : memref<1x4x2x256xf32, #tpu.memory_space<vmem>>, vector<1x1x2x256xf32>
    %17 = vector.shape_cast %16 : vector<1x1x2x256xf32> to vector<2x256xf32>
    %c0_20 = arith.constant 0 : index
    %c2_21 = arith.constant 2 : index
    %c0_22 = arith.constant 0 : index
    %c0_23 = arith.constant 0 : index
    %18 = vector.load %arg9[%c0_20, %c2_21, %c0_22, %c0_23] : memref<1x4x2x256xf32, #tpu.memory_space<vmem>>, vector<1x1x2x256xf32>
    %19 = vector.shape_cast %18 : vector<1x1x2x256xf32> to vector<2x256xf32>
    %c0_24 = arith.constant 0 : index
    %c3_25 = arith.constant 3 : index
    %c0_26 = arith.constant 0 : index
    %c0_27 = arith.constant 0 : index
    %20 = vector.load %arg9[%c0_24, %c3_25, %c0_26, %c0_27] : memref<1x4x2x256xf32, #tpu.memory_space<vmem>>, vector<1x1x2x256xf32>
    %21 = vector.shape_cast %20 : vector<1x1x2x256xf32> to vector<2x256xf32>
    %c0_28 = arith.constant 0 : index
    %c0_29 = arith.constant 0 : index
    %c0_30 = arith.constant 0 : index
    %c0_31 = arith.constant 0 : index
    %22 = vector.load %arg7[%c0_28, %c0_29, %c0_30, %c0_31] : memref<1x4x2x256xf32, #tpu.memory_space<vmem>>, vector<1x1x2x256xf32>
    %23 = vector.shape_cast %22 : vector<1x1x2x256xf32> to vector<2x256xf32>
    %24 = arith.subf %23, %15 : vector<2x256xf32>
    %25 = arith.mulf %24, %7 : vector<2x256xf32>
    %26 = arith.addf %15, %25 : vector<2x256xf32>
    %c0_32 = arith.constant 0 : index
    %c1_33 = arith.constant 1 : index
    %c0_34 = arith.constant 0 : index
    %c0_35 = arith.constant 0 : index
    %27 = vector.load %arg7[%c0_32, %c1_33, %c0_34, %c0_35] : memref<1x4x2x256xf32, #tpu.memory_space<vmem>>, vector<1x1x2x256xf32>
    %28 = vector.shape_cast %27 : vector<1x1x2x256xf32> to vector<2x256xf32>
    %29 = arith.subf %28, %17 : vector<2x256xf32>
    %30 = arith.mulf %29, %9 : vector<2x256xf32>
    %31 = arith.addf %17, %30 : vector<2x256xf32>
    %c0_36 = arith.constant 0 : index
    %c2_37 = arith.constant 2 : index
    %c0_38 = arith.constant 0 : index
    %c0_39 = arith.constant 0 : index
    %32 = vector.load %arg7[%c0_36, %c2_37, %c0_38, %c0_39] : memref<1x4x2x256xf32, #tpu.memory_space<vmem>>, vector<1x1x2x256xf32>
    %33 = vector.shape_cast %32 : vector<1x1x2x256xf32> to vector<2x256xf32>
    %34 = arith.subf %33, %19 : vector<2x256xf32>
    %35 = arith.mulf %34, %11 : vector<2x256xf32>
    %36 = arith.addf %19, %35 : vector<2x256xf32>
    %c0_40 = arith.constant 0 : index
    %c3_41 = arith.constant 3 : index
    %c0_42 = arith.constant 0 : index
    %c0_43 = arith.constant 0 : index
    %37 = vector.load %arg7[%c0_40, %c3_41, %c0_42, %c0_43] : memref<1x4x2x256xf32, #tpu.memory_space<vmem>>, vector<1x1x2x256xf32>
    %38 = vector.shape_cast %37 : vector<1x1x2x256xf32> to vector<2x256xf32>
    %39 = arith.subf %38, %21 : vector<2x256xf32>
    %40 = arith.mulf %39, %13 : vector<2x256xf32>
    %41 = arith.addf %21, %40 : vector<2x256xf32>
    %c0_44 = arith.constant 0 : index
    %c0_45 = arith.constant 0 : index
    %42 = memref.load %arg5[%c0_44, %c0_45] : memref<4x4xf32, #tpu.memory_space<smem>>
    %43 = arith.mulf %42, %5 : f32
    %44 = vector.broadcast %43 : f32 to vector<2x256xf32>
    %45 = arith.mulf %26, %44 : vector<2x256xf32>
    %c0_46 = arith.constant 0 : index
    %c1_47 = arith.constant 1 : index
    %46 = memref.load %arg5[%c0_46, %c1_47] : memref<4x4xf32, #tpu.memory_space<smem>>
    %47 = arith.mulf %46, %5 : f32
    %48 = vector.broadcast %47 : f32 to vector<2x256xf32>
    %49 = arith.mulf %31, %48 : vector<2x256xf32>
    %50 = arith.addf %45, %49 : vector<2x256xf32>
    %c0_48 = arith.constant 0 : index
    %c2_49 = arith.constant 2 : index
    %51 = memref.load %arg5[%c0_48, %c2_49] : memref<4x4xf32, #tpu.memory_space<smem>>
    %52 = arith.mulf %51, %5 : f32
    %53 = vector.broadcast %52 : f32 to vector<2x256xf32>
    %54 = arith.mulf %36, %53 : vector<2x256xf32>
    %55 = arith.addf %50, %54 : vector<2x256xf32>
    %c0_50 = arith.constant 0 : index
    %c3_51 = arith.constant 3 : index
    %56 = memref.load %arg5[%c0_50, %c3_51] : memref<4x4xf32, #tpu.memory_space<smem>>
    %57 = arith.mulf %56, %5 : f32
    %58 = vector.broadcast %57 : f32 to vector<2x256xf32>
    %59 = arith.mulf %41, %58 : vector<2x256xf32>
    %60 = arith.addf %55, %59 : vector<2x256xf32>
    %61 = arith.index_cast %arg0 : i32 to index
    %c0_52 = arith.constant 0 : index
    %62 = memref.load %arg6[%61, %c0_52] : memref<2x4xf32, #tpu.memory_space<smem>>
    %63 = vector.broadcast %62 : f32 to vector<2x256xf32>
    %64 = arith.addf %60, %63 : vector<2x256xf32>
    %65 = vector.broadcast %3 : f32 to vector<2x256xf32>
    %66 = arith.mulf %64, %65 : vector<2x256xf32>
    %67 = vector.broadcast %1 : f32 to vector<2x256xf32>
    %68 = arith.mulf %26, %67 : vector<2x256xf32>
    %69 = arith.addf %66, %68 : vector<2x256xf32>
    %70 = arith.subf %69, %15 : vector<2x256xf32>
    %71 = arith.mulf %70, %7 : vector<2x256xf32>
    %72 = arith.addf %15, %71 : vector<2x256xf32>
    %c0_53 = arith.constant 0 : index
    %c0_54 = arith.constant 0 : index
    %c0_55 = arith.constant 0 : index
    %c0_56 = arith.constant 0 : index
    %73 = vector.load %arg10[%c0_53, %c0_54, %c0_55, %c0_56] : memref<1x2x4x256xf32, #tpu.memory_space<vmem>>, vector<1x2x1x256xf32>
    %74 = vector.shape_cast %73 : vector<1x2x1x256xf32> to vector<2x256xf32>
    %75 = vector.shape_cast %72 : vector<2x256xf32> to vector<1x2x1x256xf32>
    tpu.vector_store %arg10[%c0_53, %c0_54, %c0_55, %c0_56], %75 {strides = array<i32>} : memref<1x2x4x256xf32, #tpu.memory_space<vmem>>, vector<1x2x1x256xf32>,
    %c1_57 = arith.constant 1 : index
    %c0_58 = arith.constant 0 : index
    %76 = memref.load %arg5[%c1_57, %c0_58] : memref<4x4xf32, #tpu.memory_space<smem>>
    %77 = arith.mulf %76, %5 : f32
    %78 = vector.broadcast %77 : f32 to vector<2x256xf32>
    %79 = arith.mulf %26, %78 : vector<2x256xf32>
    %c1_59 = arith.constant 1 : index
    %c1_60 = arith.constant 1 : index
    %80 = memref.load %arg5[%c1_59, %c1_60] : memref<4x4xf32, #tpu.memory_space<smem>>
    %81 = arith.mulf %80, %5 : f32
    %82 = vector.broadcast %81 : f32 to vector<2x256xf32>
    %83 = arith.mulf %31, %82 : vector<2x256xf32>
    %84 = arith.addf %79, %83 : vector<2x256xf32>
    %c1_61 = arith.constant 1 : index
    %c2_62 = arith.constant 2 : index
    %85 = memref.load %arg5[%c1_61, %c2_62] : memref<4x4xf32, #tpu.memory_space<smem>>
    %86 = arith.mulf %85, %5 : f32
    %87 = vector.broadcast %86 : f32 to vector<2x256xf32>
    %88 = arith.mulf %36, %87 : vector<2x256xf32>
    %89 = arith.addf %84, %88 : vector<2x256xf32>
    %c1_63 = arith.constant 1 : index
    %c3_64 = arith.constant 3 : index
    %90 = memref.load %arg5[%c1_63, %c3_64] : memref<4x4xf32, #tpu.memory_space<smem>>
    %91 = arith.mulf %90, %5 : f32
    %92 = vector.broadcast %91 : f32 to vector<2x256xf32>
    %93 = arith.mulf %41, %92 : vector<2x256xf32>
    %94 = arith.addf %89, %93 : vector<2x256xf32>
    %95 = arith.index_cast %arg0 : i32 to index
    %c1_65 = arith.constant 1 : index
    %96 = memref.load %arg6[%95, %c1_65] : memref<2x4xf32, #tpu.memory_space<smem>>
    %97 = vector.broadcast %96 : f32 to vector<2x256xf32>
    %98 = arith.addf %94, %97 : vector<2x256xf32>
    %99 = vector.broadcast %3 : f32 to vector<2x256xf32>
    %100 = arith.mulf %98, %99 : vector<2x256xf32>
    %101 = vector.broadcast %1 : f32 to vector<2x256xf32>
    %102 = arith.mulf %31, %101 : vector<2x256xf32>
    %103 = arith.addf %100, %102 : vector<2x256xf32>
    %104 = arith.subf %103, %17 : vector<2x256xf32>
    %105 = arith.mulf %104, %9 : vector<2x256xf32>
    %106 = arith.addf %17, %105 : vector<2x256xf32>
    %c0_66 = arith.constant 0 : index
    %c0_67 = arith.constant 0 : index
    %c1_68 = arith.constant 1 : index
    %c0_69 = arith.constant 0 : index
    %107 = vector.load %arg10[%c0_66, %c0_67, %c1_68, %c0_69] : memref<1x2x4x256xf32, #tpu.memory_space<vmem>>, vector<1x2x1x256xf32>
    %108 = vector.shape_cast %107 : vector<1x2x1x256xf32> to vector<2x256xf32>
    %109 = vector.shape_cast %106 : vector<2x256xf32> to vector<1x2x1x256xf32>
    tpu.vector_store %arg10[%c0_66, %c0_67, %c1_68, %c0_69], %109 {strides = array<i32>} : memref<1x2x4x256xf32, #tpu.memory_space<vmem>>, vector<1x2x1x256xf32>,
    %c2_70 = arith.constant 2 : index
    %c0_71 = arith.constant 0 : index
    %110 = memref.load %arg5[%c2_70, %c0_71] : memref<4x4xf32, #tpu.memory_space<smem>>
    %111 = arith.mulf %110, %5 : f32
    %112 = vector.broadcast %111 : f32 to vector<2x256xf32>
    %113 = arith.mulf %26, %112 : vector<2x256xf32>
    %c2_72 = arith.constant 2 : index
    %c1_73 = arith.constant 1 : index
    %114 = memref.load %arg5[%c2_72, %c1_73] : memref<4x4xf32, #tpu.memory_space<smem>>
    %115 = arith.mulf %114, %5 : f32
    %116 = vector.broadcast %115 : f32 to vector<2x256xf32>
    %117 = arith.mulf %31, %116 : vector<2x256xf32>
    %118 = arith.addf %113, %117 : vector<2x256xf32>
    %c2_74 = arith.constant 2 : index
    %c2_75 = arith.constant 2 : index
    %119 = memref.load %arg5[%c2_74, %c2_75] : memref<4x4xf32, #tpu.memory_space<smem>>
    %120 = arith.mulf %119, %5 : f32
    %121 = vector.broadcast %120 : f32 to vector<2x256xf32>
    %122 = arith.mulf %36, %121 : vector<2x256xf32>
    %123 = arith.addf %118, %122 : vector<2x256xf32>
    %c2_76 = arith.constant 2 : index
    %c3_77 = arith.constant 3 : index
    %124 = memref.load %arg5[%c2_76, %c3_77] : memref<4x4xf32, #tpu.memory_space<smem>>
    %125 = arith.mulf %124, %5 : f32
    %126 = vector.broadcast %125 : f32 to vector<2x256xf32>
    %127 = arith.mulf %41, %126 : vector<2x256xf32>
    %128 = arith.addf %123, %127 : vector<2x256xf32>
    %129 = arith.index_cast %arg0 : i32 to index
    %c2_78 = arith.constant 2 : index
    %130 = memref.load %arg6[%129, %c2_78] : memref<2x4xf32, #tpu.memory_space<smem>>
    %131 = vector.broadcast %130 : f32 to vector<2x256xf32>
    %132 = arith.addf %128, %131 : vector<2x256xf32>
    %133 = vector.broadcast %3 : f32 to vector<2x256xf32>
    %134 = arith.mulf %132, %133 : vector<2x256xf32>
    %135 = vector.broadcast %1 : f32 to vector<2x256xf32>
    %136 = arith.mulf %36, %135 : vector<2x256xf32>
    %137 = arith.addf %134, %136 : vector<2x256xf32>
    %138 = arith.subf %137, %19 : vector<2x256xf32>
    %139 = arith.mulf %138, %11 : vector<2x256xf32>
    %140 = arith.addf %19, %139 : vector<2x256xf32>
    %c0_79 = arith.constant 0 : index
    %c0_80 = arith.constant 0 : index
    %c2_81 = arith.constant 2 : index
    %c0_82 = arith.constant 0 : index
    %141 = vector.load %arg10[%c0_79, %c0_80, %c2_81, %c0_82] : memref<1x2x4x256xf32, #tpu.memory_space<vmem>>, vector<1x2x1x256xf32>
    %142 = vector.shape_cast %141 : vector<1x2x1x256xf32> to vector<2x256xf32>
    %143 = vector.shape_cast %140 : vector<2x256xf32> to vector<1x2x1x256xf32>
    tpu.vector_store %arg10[%c0_79, %c0_80, %c2_81, %c0_82], %143 {strides = array<i32>} : memref<1x2x4x256xf32, #tpu.memory_space<vmem>>, vector<1x2x1x256xf32>,
    %c3_83 = arith.constant 3 : index
    %c0_84 = arith.constant 0 : index
    %144 = memref.load %arg5[%c3_83, %c0_84] : memref<4x4xf32, #tpu.memory_space<smem>>
    %145 = arith.mulf %144, %5 : f32
    %146 = vector.broadcast %145 : f32 to vector<2x256xf32>
    %147 = arith.mulf %26, %146 : vector<2x256xf32>
    %c3_85 = arith.constant 3 : index
    %c1_86 = arith.constant 1 : index
    %148 = memref.load %arg5[%c3_85, %c1_86] : memref<4x4xf32, #tpu.memory_space<smem>>
    %149 = arith.mulf %148, %5 : f32
    %150 = vector.broadcast %149 : f32 to vector<2x256xf32>
    %151 = arith.mulf %31, %150 : vector<2x256xf32>
    %152 = arith.addf %147, %151 : vector<2x256xf32>
    %c3_87 = arith.constant 3 : index
    %c2_88 = arith.constant 2 : index
    %153 = memref.load %arg5[%c3_87, %c2_88] : memref<4x4xf32, #tpu.memory_space<smem>>
    %154 = arith.mulf %153, %5 : f32
    %155 = vector.broadcast %154 : f32 to vector<2x256xf32>
    %156 = arith.mulf %36, %155 : vector<2x256xf32>
    %157 = arith.addf %152, %156 : vector<2x256xf32>
    %c3_89 = arith.constant 3 : index
    %c3_90 = arith.constant 3 : index
    %158 = memref.load %arg5[%c3_89, %c3_90] : memref<4x4xf32, #tpu.memory_space<smem>>
    %159 = arith.mulf %158, %5 : f32
    %160 = vector.broadcast %159 : f32 to vector<2x256xf32>
    %161 = arith.mulf %41, %160 : vector<2x256xf32>
    %162 = arith.addf %157, %161 : vector<2x256xf32>
    %163 = arith.index_cast %arg0 : i32 to index
    %c3_91 = arith.constant 3 : index
    %164 = memref.load %arg6[%163, %c3_91] : memref<2x4xf32, #tpu.memory_space<smem>>
    %165 = vector.broadcast %164 : f32 to vector<2x256xf32>
    %166 = arith.addf %162, %165 : vector<2x256xf32>
    %167 = vector.broadcast %3 : f32 to vector<2x256xf32>
    %168 = arith.mulf %166, %167 : vector<2x256xf32>
    %169 = vector.broadcast %1 : f32 to vector<2x256xf32>
    %170 = arith.mulf %41, %169 : vector<2x256xf32>
    %171 = arith.addf %168, %170 : vector<2x256xf32>
    %172 = arith.subf %171, %21 : vector<2x256xf32>
    %173 = arith.mulf %172, %13 : vector<2x256xf32>
    %174 = arith.addf %21, %173 : vector<2x256xf32>
    %c0_92 = arith.constant 0 : index
    %c0_93 = arith.constant 0 : index
    %c3_94 = arith.constant 3 : index
    %c0_95 = arith.constant 0 : index
    %175 = vector.load %arg10[%c0_92, %c0_93, %c3_94, %c0_95] : memref<1x2x4x256xf32, #tpu.memory_space<vmem>>, vector<1x2x1x256xf32>
    %176 = vector.shape_cast %175 : vector<1x2x1x256xf32> to vector<2x256xf32>
    %177 = vector.shape_cast %174 : vector<2x256xf32> to vector<1x2x1x256xf32>
    tpu.vector_store %arg10[%c0_92, %c0_93, %c3_94, %c0_95], %177 {strides = array<i32>} : memref<1x2x4x256xf32, #tpu.memory_space<vmem>>, vector<1x2x1x256xf32>,
    return
  }
  func.func @transform_0(%arg0: i32, %arg1: i32) -> i32 {
    %c0_i32 = arith.constant 0 : i32
    %c0_i32_0 = arith.constant 0 : i32
    return %c0_i32 : i32
  }
  func.func @transform_1(%arg0: i32, %arg1: i32) -> i32 {
    %c0_i32 = arith.constant 0 : i32
    %c0_i32_0 = arith.constant 0 : i32
    return %c0_i32 : i32
  }
  func.func @transform_2(%arg0: i32, %arg1: i32) -> i32 {
    %c0_i32 = arith.constant 0 : i32
    %c0_i32_0 = arith.constant 0 : i32
    return %c0_i32 : i32
  }
  func.func @transform_3(%arg0: i32, %arg1: i32) -> (i32, i32) {
    %c0_i32 = arith.constant 0 : i32
    %c0_i32_0 = arith.constant 0 : i32
    %c0_i32_1 = arith.constant 0 : i32
    return %c0_i32, %c0_i32_0 : i32, i32
  }
  func.func @transform_4(%arg0: i32, %arg1: i32) -> (i32, i32) {
    %c0_i32 = arith.constant 0 : i32
    %c0_i32_0 = arith.constant 0 : i32
    %c0_i32_1 = arith.constant 0 : i32
    return %c0_i32, %c0_i32_0 : i32, i32
  }
  func.func @transform_5(%arg0: i32, %arg1: i32) -> (i32, i32, i32, i32) {
    %c0_i32 = arith.constant 0 : i32
    %c0_i32_0 = arith.constant 0 : i32
    %c0_i32_1 = arith.constant 0 : i32
    return %arg0, %c0_i32, %arg1, %c0_i32_0 : i32, i32, i32, i32
  }
  func.func @transform_6(%arg0: i32, %arg1: i32) -> (i32, i32, i32, i32) {
    %c0_i32 = arith.constant 0 : i32
    %c0_i32_0 = arith.constant 0 : i32
    %c0_i32_1 = arith.constant 0 : i32
    return %arg0, %c0_i32, %arg1, %c0_i32_0 : i32, i32, i32, i32
  }
  func.func @transform_7(%arg0: i32, %arg1: i32) -> (i32, i32, i32, i32) {
    %c0_i32 = arith.constant 0 : i32
    %c0_i32_0 = arith.constant 0 : i32
    %c0_i32_1 = arith.constant 0 : i32
    return %arg0, %c0_i32, %arg1, %c0_i32_0 : i32, i32, i32, i32
  }
  func.func @transform_8(%arg0: i32, %arg1: i32) -> (i32, i32, i32, i32) {
    %c0_i32 = arith.constant 0 : i32
    %c0_i32_0 = arith.constant 0 : i32
    %c0_i32_1 = arith.constant 0 : i32
    return %arg0, %arg1, %c0_i32, %c0_i32_0 : i32, i32, i32, i32
  }
}

</mosaic_0001>

<llo_original>
// kernel: tpu_custom_call.1
$region0: #{tpu_custom_call.1}
  #allocation0 [shape = 'u32[]', space=smem, size = 0x4, offset = 0x4, fixed_abs, tag = 'smem constant byte address 0x4 - core index']
  #allocation1 [shape = 'u32[72,128]{1,0:T(1,128)}', space=vmem, size = 0x9000, scoped, tag = 'internal scratch']
  %s0 = inlined_call_operand.hbm [shape: f32[2], index: 0, kind: input, shape index: {}]
  %s1 = inlined_call_operand.hbm [shape: f32[2], index: 1, kind: input, shape index: {}]
  %s2 = inlined_call_operand.vmem [shape: f32[2], index: 2, kind: input, shape index: {}]
  %s3 = inlined_call_operand.hbm [shape: f32[4,4], index: 3, kind: input, shape index: {}]
  %s4 = inlined_call_operand.vmem [shape: f32[2,4], index: 4, kind: input, shape index: {}]
  %s5 = inlined_call_operand.hbm [shape: f32[2,4,2,256], index: 5, kind: input, shape index: {}]
  %s6 = inlined_call_operand.hbm [shape: f32[2,4,2,256], index: 6, kind: input, shape index: {}]
  %s7 = inlined_call_operand.hbm [shape: f32[2,4,2,256], index: 7, kind: input, shape index: {}]
  %s8 = inlined_call_operand.hbm [shape: f32[2,2,4,256], index: 8, kind: output, shape index: {}]
  %s9 = sld [smem:[#allocation0]]
  $region97: #{tpu_custom_call.1} parent=0
    _
  %s11 = ssub.s32 1, %s9
  %s12 = scalar_select 0, %s11, %s9
  $region1: #{tpu_custom_call.1} parent=0
    #allocation2 [shape = 'u8[512]{0}', space=smem, size = 0x200, scoped, tag = 'input window, operand 0, single buffered']
    #allocation3 [shape = 's32[2]{0}', space=sflag, size = 0x8, scoped, tag = 'scoped memory for tpu_custom_call.1']
    #allocation4 [shape = 's32[2]{0}', space=sflag, size = 0x8, scoped, tag = 'scoped memory for tpu_custom_call.1']
    #allocation5 [shape = 's32[2]{0}', space=sflag, size = 0x8, scoped, tag = 'scoped memory for tpu_custom_call.1']
    #allocation6 [shape = 's32[2]{0}', space=sflag, size = 0x8, scoped, tag = 'scoped memory for tpu_custom_call.1']
    #allocation7 [shape = 'u8[512]{0}', space=smem, size = 0x200, scoped, tag = 'input window, operand 1, single buffered']
    #allocation8 [shape = 's32[1]{0}', space=sflag, size = 0x4, scoped, tag = 'scoped memory for tpu_custom_call.1']
    #allocation9 [shape = 'u8[512]{0}', space=smem, size = 0x200, scoped, tag = 'input window, operand 2, single buffered']
    #allocation10 [shape = 'u8[2048]{0}', space=smem, size = 0x800, scoped, tag = 'input window, operand 3, single buffered']
    #allocation11 [shape = 'u8[1024]{0}', space=smem, size = 0x400, scoped, tag = 'input window, operand 4, single buffered']
    #allocation12 [shape = 's32[1]{0}', space=sflag, size = 0x4, scoped, tag = 'scoped memory for tpu_custom_call.1']
    #allocation13 [shape = 'u8[16384]{0}', space=vmem, size = 0x4000, scoped, tag = 'input window, operand 5']
    #allocation14 [shape = 'u8[16384]{0}', space=vmem, size = 0x4000, scoped, tag = 'input window, operand 6']
    #allocation15 [shape = 's32[2]{0}', space=sflag, size = 0x8, scoped, tag = 'scoped memory for tpu_custom_call.1']
    #allocation16 [shape = 'u8[16384]{0}', space=vmem, size = 0x4000, scoped, tag = 'input window, operand 7']
    #allocation17 [shape = 'u8[16384]{0}', space=vmem, size = 0x4000, scoped, tag = 'output window, operand 0']
    %13 = vsyncpa [#allocation5], 0
    %14 = vsyncpa [#allocation8], 0
    %15 = vsyncpa [#allocation6], 0
    %16 = vsyncpa [#allocation12], 0
    %17 = vsyncpa [#allocation3], 0
    %s18 = scalar_lea.sflag [#allocation3], 1
    %19 = vsyncpa %s18, 0
    %20 = vsyncpa [#allocation15], 0
    %s21 = scalar_lea.sflag [#allocation15], 1
    %22 = vsyncpa %s21, 0
    %23 = vsyncpa [#allocation4], 0
    %s24 = scalar_lea.sflag [#allocation4], 1
    %25 = vsyncpa %s24, 0
    loop: start=0, step=1, limit=4
    $region2: #{tpu_custom_call.1} parent=1 // loop_pre_header
      _
    $region3: #{tpu_custom_call.1} parent=1 // loop_header
      %s27 = sphi 0, %s31
      %p28 = scmp.ge.s32.totalorder %s27, 4
      %s34 = sphi 0, %s46
      %s35 = sphi 0, %s42
      %s36 = sphi 0, %s34
      %s37 = sphi 0, %s35
      %s38 = sphi 0, %s36
      %s39 = sphi 0, %s37
      %s47 = sphi 0, %s47
      %s49 = sphi 0, %s47
      %s50 = sphi 0, %s49
      %s64 = sphi 0, %s50
      %s68 = sphi 0, %s68
      %s70 = sphi 0, %s68
      %s71 = sphi 0, %s70
      %s85 = sphi 0, %s71
      %s89 = sphi 0, %s89
      %s91 = sphi 0, %s89
      %s92 = sphi 0, %s91
      %s106 = sphi 0, %s92
      %s110 = sphi 0, %s110
      %s112 = sphi 0, %s110
      %s113 = sphi 0, %s112
      %s127 = sphi 0, %s113
      %s131 = sphi 0, %s131
      %s133 = sphi 0, %s131
      %s134 = sphi 0, %s133
      %s148 = sphi 0, %s134
      %s156 = sphi 0, %s158
      %s159 = sphi 0, %s156
      %s160 = sphi 0, %s159
      %s176 = sphi 0, %s160
      %s184 = sphi 0, %s186
      %s187 = sphi 0, %s184
      %s188 = sphi 0, %s187
      %s204 = sphi 0, %s188
      %s212 = sphi 0, %s214
      %s215 = sphi 0, %s212
      %s216 = sphi 0, %s215
      %s232 = sphi 0, %s216
      %s240 = sphi 0, %s242
      %s243 = sphi 0, %s240
      %s244 = sphi 0, %s243
      %s260 = sphi 0, %s244
    $region4: #{tpu_custom_call.1} parent=1 // loop_header_branch
      %30 = sbr.rel (%p28) target = $region8
    $region5: #{tpu_custom_call.1} parent=1 // loop_body
      %s32 = ssub.s32 %s27, 1
      %s33 = ssub.s32 %s27, 2
      %s40 = sadd.s32 1, %s35
      %p41 = scmp.ge.s32.totalorder %s40, 1
      %s42 = scalar_select %p41, 0, %s40
      %s43 = sadd.s32 1, %s34
      %s44 = scalar_select %p41, %s43, %s34
      %p45 = scmp.ge.s32.totalorder %s44, 2
      %s46 = scalar_select %p45, 0, %s44
      %s48 = sadd.s32 %s47, 1
      %p51 = scmp.eq.s32.totalorder %s27, 1
      %p52 = scmp.ne.s32.totalorder %s47, %s49
      %p53 = scmp.eq.s32.totalorder %s27, 0
      %p54 = por %p52, %p53
      %p55 = scmp.ne.s32.totalorder %s47, %s49
      %p56 = scmp.eq.s32.totalorder %s32, 1
      %p57 = por %p55, %p56
      %p58 = scmp.ne.s32.totalorder %s49, %s50
      %p59 = scmp.eq.s32.totalorder %s32, 0
      %p60 = por %p58, %p59
      %p61 = scmp.ne.s32.totalorder %s49, %s50
      %p62 = scmp.eq.s32.totalorder %s33, 1
      %p63 = por %p61, %p62
      %p65 = scmp.ne.s32.totalorder %s50, %s64
      %p66 = scmp.eq.s32.totalorder %s33, 0
      %p67 = por %p65, %p66
      %s69 = sadd.s32 %s68, 1
      %p72 = scmp.eq.s32.totalorder %s27, 1
      %p73 = scmp.ne.s32.totalorder %s68, %s70
      %p74 = scmp.eq.s32.totalorder %s27, 0
      %p75 = por %p73, %p74
      %p76 = scmp.ne.s32.totalorder %s68, %s70
      %p77 = scmp.eq.s32.totalorder %s32, 1
      %p78 = por %p76, %p77
      %p79 = scmp.ne.s32.totalorder %s70, %s71
      %p80 = scmp.eq.s32.totalorder %s32, 0
      %p81 = por %p79, %p80
      %p82 = scmp.ne.s32.totalorder %s70, %s71
      %p83 = scmp.eq.s32.totalorder %s33, 1
      %p84 = por %p82, %p83
      %p86 = scmp.ne.s32.totalorder %s71, %s85
      %p87 = scmp.eq.s32.totalorder %s33, 0
      %p88 = por %p86, %p87
      %s90 = sadd.s32 %s89, 1
      %p93 = scmp.eq.s32.totalorder %s27, 1
      %p94 = scmp.ne.s32.totalorder %s89, %s91
      %p95 = scmp.eq.s32.totalorder %s27, 0
      %p96 = por %p94, %p95
      %p97 = scmp.ne.s32.totalorder %s89, %s91
      %p98 = scmp.eq.s32.totalorder %s32, 1
      %p99 = por %p97, %p98
      %p100 = scmp.ne.s32.totalorder %s91, %s92
      %p101 = scmp.eq.s32.totalorder %s32, 0
      %p102 = por %p100, %p101
      %p103 = scmp.ne.s32.totalorder %s91, %s92
      %p104 = scmp.eq.s32.totalorder %s33, 1
      %p105 = por %p103, %p104
      %p107 = scmp.ne.s32.totalorder %s92, %s106
      %p108 = scmp.eq.s32.totalorder %s33, 0
      %p109 = por %p107, %p108
      %s111 = sadd.s32 %s110, 1
      %p114 = scmp.eq.s32.totalorder %s27, 1
      %p115 = scmp.ne.s32.totalorder %s110, %s112
      %p116 = scmp.eq.s32.totalorder %s27, 0
      %p117 = por %p115, %p116
      %p118 = scmp.ne.s32.totalorder %s110, %s112
      %p119 = scmp.eq.s32.totalorder %s32, 1
      %p120 = por %p118, %p119
      %p121 = scmp.ne.s32.totalorder %s112, %s113
      %p122 = scmp.eq.s32.totalorder %s32, 0
      %p123 = por %p121, %p122
      %p124 = scmp.ne.s32.totalorder %s112, %s113
      %p125 = scmp.eq.s32.totalorder %s33, 1
      %p126 = por %p124, %p125
      %p128 = scmp.ne.s32.totalorder %s113, %s127
      %p129 = scmp.eq.s32.totalorder %s33, 0
      %p130 = por %p128, %p129
      %s132 = sadd.s32 %s131, 1
      %p135 = scmp.eq.s32.totalorder %s27, 1
      %p136 = scmp.ne.s32.totalorder %s131, %s133
      %p137 = scmp.eq.s32.totalorder %s27, 0
      %p138 = por %p136, %p137
      %p139 = scmp.ne.s32.totalorder %s131, %s133
      %p140 = scmp.eq.s32.totalorder %s32, 1
      %p141 = por %p139, %p140
      %p142 = scmp.ne.s32.totalorder %s133, %s134
      %p143 = scmp.eq.s32.totalorder %s32, 0
      %p144 = por %p142, %p143
      %p145 = scmp.ne.s32.totalorder %s133, %s134
      %p146 = scmp.eq.s32.totalorder %s33, 1
      %p147 = por %p145, %p146
      %p149 = scmp.ne.s32.totalorder %s134, %s148
      %p150 = scmp.eq.s32.totalorder %s33, 0
      %p151 = por %p149, %p150
      %s152 = ssub.s32 %s34, %s46
      %s153 = ssub.s32 %s35, %s42
      %s154 = sor.u32 %s152, %s153
      %p155 = scmp.eq.s32.totalorder %s154, 0
      %s157 = sadd.s32 %s156, 1
      %s158 = scalar_select %p155, %s156, %s157
      %p161 = pneg %p155
      %p162 = scmp.eq.s32.totalorder %s27, 1
      %p163 = por %p161, %p162
      %p164 = scmp.ne.s32.totalorder %s156, %s159
      %p165 = scmp.eq.s32.totalorder %s27, 0
      %p166 = por %p164, %p165
      %p167 = scmp.ne.s32.totalorder %s156, %s159
      %p168 = scmp.eq.s32.totalorder %s32, 1
      %p169 = por %p167, %p168
      %p170 = scmp.ne.s32.totalorder %s159, %s160
      %p171 = scmp.eq.s32.totalorder %s32, 0
      %p172 = por %p170, %p171
      %p173 = scmp.ne.s32.totalorder %s159, %s160
      %p174 = scmp.eq.s32.totalorder %s33, 1
      %p175 = por %p173, %p174
      %p177 = scmp.ne.s32.totalorder %s160, %s176
      %p178 = scmp.eq.s32.totalorder %s33, 0
      %p179 = por %p177, %p178
      %s180 = ssub.s32 %s34, %s46
      %s181 = ssub.s32 %s35, %s42
      %s182 = sor.u32 %s180, %s181
      %p183 = scmp.eq.s32.totalorder %s182, 0
      %s185 = sadd.s32 %s184, 1
      %s186 = scalar_select %p183, %s184, %s185
      %p189 = pneg %p183
      %p190 = scmp.eq.s32.totalorder %s27, 1
      %p191 = por %p189, %p190
      %p192 = scmp.ne.s32.totalorder %s184, %s187
      %p193 = scmp.eq.s32.totalorder %s27, 0
      %p194 = por %p192, %p193
      %p195 = scmp.ne.s32.totalorder %s184, %s187
      %p196 = scmp.eq.s32.totalorder %s32, 1
      %p197 = por %p195, %p196
      %p198 = scmp.ne.s32.totalorder %s187, %s188
      %p199 = scmp.eq.s32.totalorder %s32, 0
      %p200 = por %p198, %p199
      %p201 = scmp.ne.s32.totalorder %s187, %s188
      %p202 = scmp.eq.s32.totalorder %s33, 1
      %p203 = por %p201, %p202
      %p205 = scmp.ne.s32.totalorder %s188, %s204
      %p206 = scmp.eq.s32.totalorder %s33, 0
      %p207 = por %p205, %p206
      %s208 = ssub.s32 %s34, %s46
      %s209 = ssub.s32 %s35, %s42
      %s210 = sor.u32 %s208, %s209
      %p211 = scmp.eq.s32.totalorder %s210, 0
      %s213 = sadd.s32 %s212, 1
      %s214 = scalar_select %p211, %s212, %s213
      %p217 = pneg %p211
      %p218 = scmp.eq.s32.totalorder %s27, 1
      %p219 = por %p217, %p218
      %p220 = scmp.ne.s32.totalorder %s212, %s215
      %p221 = scmp.eq.s32.totalorder %s27, 0
      %p222 = por %p220, %p221
      %p223 = scmp.ne.s32.totalorder %s212, %s215
      %p224 = scmp.eq.s32.totalorder %s32, 1
      %p225 = por %p223, %p224
      %p226 = scmp.ne.s32.totalorder %s215, %s216
      %p227 = scmp.eq.s32.totalorder %s32, 0
      %p228 = por %p226, %p227
      %p229 = scmp.ne.s32.totalorder %s215, %s216
      %p230 = scmp.eq.s32.totalorder %s33, 1
      %p231 = por %p229, %p230
      %p233 = scmp.ne.s32.totalorder %s216, %s232
      %p234 = scmp.eq.s32.totalorder %s33, 0
      %p235 = por %p233, %p234
      %s236 = ssub.s32 %s34, %s46
      %s237 = ssub.s32 %s35, %s42
      %s238 = sor.u32 %s236, %s237
      %p239 = scmp.eq.s32.totalorder %s238, 0
      %s241 = sadd.s32 %s240, 1
      %s242 = scalar_select %p239, %s240, %s241
      %p245 = pneg %p239
      %p246 = scmp.eq.s32.totalorder %s27, 1
      %p247 = por %p245, %p246
      %p248 = scmp.ne.s32.totalorder %s240, %s243
      %p249 = scmp.eq.s32.totalorder %s27, 0
      %p250 = por %p248, %p249
      %p251 = scmp.ne.s32.totalorder %s240, %s243
      %p252 = scmp.eq.s32.totalorder %s32, 1
      %p253 = por %p251, %p252
      %p254 = scmp.ne.s32.totalorder %s243, %s244
      %p255 = scmp.eq.s32.totalorder %s32, 0
      %p256 = por %p254, %p255
      %p257 = scmp.ne.s32.totalorder %s243, %s244
      %p258 = scmp.eq.s32.totalorder %s33, 1
      %p259 = por %p257, %p258
      %p261 = scmp.ne.s32.totalorder %s244, %s260
      %p262 = scmp.eq.s32.totalorder %s33, 0
      %p263 = por %p261, %p262
      %p264 = scmp.le.s32.totalorder 1, %s27
      %p265 = scmp.lt.s32.totalorder %s27, 3
      %p266 = pnand %p264, %p265
      %p267 = pneg %p266
      // Predicated region
      $region9: #{tpu_custom_call.1} parent=5 // pred_check
        _
      $region10: #{tpu_custom_call.1} parent=5 // pred_check_branch
        %269 = sbr.rel (%p266) target = $region12
      $region11: #{tpu_custom_call.1} parent=5 // pred_region
        %s270 = ssub.s32 %s27, 1
        // Predicated region
        $region13: #{tpu_custom_call.1} parent=11 // pred_check
          %p271 = pneg %p60
        $region14: #{tpu_custom_call.1} parent=11 // pred_check_branch
          %273 = sbr.rel (%p271) target = $region16
        $region15: #{tpu_custom_call.1} parent=11 // pred_region
          %275 = vsyncadd [#allocation5], 0
          %s277 = sshll.u32 %s0, 4
          %s278 = int_to_ptr.hbm [resolvable:$true] %s277
          %280 = dma.hbm_to_smem %s278, 16, [#allocation2], [#allocation5]
        $region16: #{tpu_custom_call.1} parent=11 // pred_fallthru
          _
        // Predicated region
        $region17: #{tpu_custom_call.1} parent=11 // pred_check
          %p281 = pneg %p81
        $region18: #{tpu_custom_call.1} parent=11 // pred_check_branch
          %283 = sbr.rel (%p281) target = $region20
        $region19: #{tpu_custom_call.1} parent=11 // pred_region
          %285 = vsyncadd [#allocation8], 0
          %s287 = sshll.u32 %s1, 4
          %s288 = int_to_ptr.hbm [resolvable:$true] %s287
          %290 = dma.hbm_to_smem %s288, 16, [#allocation7], [#allocation8]
        $region20: #{tpu_custom_call.1} parent=11 // pred_fallthru
          _
        // Predicated region
        $region21: #{tpu_custom_call.1} parent=11 // pred_check
          %p291 = pneg %p102
        $region22: #{tpu_custom_call.1} parent=11 // pred_check_branch
          %293 = sbr.rel (%p291) target = $region24
        $region23: #{tpu_custom_call.1} parent=11 // pred_region
          %295 = vsyncadd [#allocation6], 0
          %s297 = sshll.u32 %s2, 4
          %s298 = int_to_ptr.vmem [resolvable:$true] %s297
          %300 = dma.vmem_to_smem %s298, 16, [#allocation9], [#allocation6]
        $region24: #{tpu_custom_call.1} parent=11 // pred_fallthru
          _
        // Predicated region
        $region25: #{tpu_custom_call.1} parent=11 // pred_check
          %p301 = pneg %p123
        $region26: #{tpu_custom_call.1} parent=11 // pred_check_branch
          %303 = sbr.rel (%p301) target = $region28
        $region27: #{tpu_custom_call.1} parent=11 // pred_region
          %305 = vsyncadd [#allocation8], 0
          %s307 = sshll.u32 %s3, 4
          %s308 = int_to_ptr.hbm [resolvable:$true] %s307
          %310 = dma.hbm_to_smem %s308, 64, [#allocation10], [#allocation8]
        $region28: #{tpu_custom_call.1} parent=11 // pred_fallthru
          _
        // Predicated region
        $region29: #{tpu_custom_call.1} parent=11 // pred_check
          %p311 = pneg %p144
        $region30: #{tpu_custom_call.1} parent=11 // pred_check_branch
          %313 = sbr.rel (%p311) target = $region32
        $region31: #{tpu_custom_call.1} parent=11 // pred_region
          %315 = vsyncadd [#allocation12], 0
          %s317 = sshll.u32 %s4, 4
          %s318 = int_to_ptr.vmem [resolvable:$true] %s317
          %320 = dma.vmem_to_smem %s318, 32, [#allocation11], [#allocation12]
        $region32: #{tpu_custom_call.1} parent=11 // pred_fallthru
          _
      $region12: #{tpu_custom_call.1} parent=5 // pred_fallthru
        _
      %p321 = scmp.lt.s32.totalorder %s27, 2
      // Predicated region
      $region33: #{tpu_custom_call.1} parent=5 // pred_check
        %p322 = pneg %p321
      $region34: #{tpu_custom_call.1} parent=5 // pred_check_branch
        %324 = sbr.rel (%p322) target = $region36
      $region35: #{tpu_custom_call.1} parent=5 // pred_region
        // Predicated region
        $region37: #{tpu_custom_call.1} parent=35 // pred_check
          %p325 = pneg %p166
        $region38: #{tpu_custom_call.1} parent=35 // pred_check_branch
          %327 = sbr.rel (%p325) target = $region40
        $region39: #{tpu_custom_call.1} parent=35 // pred_region
          %s328 = sand.u32 %s156, 1
          %s329 = scalar_lea.sflag [#allocation3], %s328
          %s330 = sand.u32 %s156, 1
          %s331 = smul.addr %s330, 16
          %s332 = scalar_lea.vmem [#allocation13], %s331
          %334 = vsyncadd %s329, 0
          %s335 = smul.addr %s35, 2
          %s336 = smul.addr %s34, 8
          %s337 = sadd.s32 %s335, %s336
          %s338 = smul.addr %s337, 2
          %s339 = scalar_lea.hbm %s5, %s338
          %s340 = sshll.u32 %s339, 4
          %s341 = int_to_ptr.hbm [resolvable:$true] %s340
          %s342 = sshll.u32 %s332, 4
          %s343 = int_to_ptr.vmem [resolvable:$true] %s342
          %348 = dma.hbm_to_vmem [thread:$0]  %s341, 256, %s343, %s329, 64, 64, 4
        $region40: #{tpu_custom_call.1} parent=35 // pred_fallthru
          _
        // Predicated region
        $region41: #{tpu_custom_call.1} parent=35 // pred_check
          %p349 = pneg %p194
        $region42: #{tpu_custom_call.1} parent=35 // pred_check_branch
          %351 = sbr.rel (%p349) target = $region44
        $region43: #{tpu_custom_call.1} parent=35 // pred_region
          %s352 = sand.u32 %s27, 1
          %s353 = scalar_lea.sflag [#allocation15], %s352
          %s354 = sand.u32 %s184, 1
          %s355 = smul.addr %s354, 16
          %s356 = scalar_lea.vmem [#allocation14], %s355
          %358 = vsyncadd %s353, 0
          %s359 = smul.addr %s35, 2
          %s360 = smul.addr %s34, 8
          %s361 = sadd.s32 %s359, %s360
          %s362 = smul.addr %s361, 2
          %s363 = scalar_lea.hbm %s6, %s362
          %s364 = sshll.u32 %s363, 4
          %s365 = int_to_ptr.hbm [resolvable:$true] %s364
          %s366 = sshll.u32 %s356, 4
          %s367 = int_to_ptr.vmem [resolvable:$true] %s366
          %372 = dma.hbm_to_vmem [thread:$0]  %s365, 256, %s367, %s353, 64, 64, 4
        $region44: #{tpu_custom_call.1} parent=35 // pred_fallthru
          _
        // Predicated region
        $region45: #{tpu_custom_call.1} parent=35 // pred_check
          %p373 = pneg %p222
        $region46: #{tpu_custom_call.1} parent=35 // pred_check_branch
          %375 = sbr.rel (%p373) target = $region48
        $region47: #{tpu_custom_call.1} parent=35 // pred_region
          %s376 = sand.u32 %s27, 1
          %s377 = scalar_lea.sflag [#allocation15], %s376
          %s378 = sand.u32 %s212, 1
          %s379 = smul.addr %s378, 16
          %s380 = scalar_lea.vmem [#allocation16], %s379
          %382 = vsyncadd %s377, 0
          %s383 = smul.addr %s35, 2
          %s384 = smul.addr %s34, 8
          %s385 = sadd.s32 %s383, %s384
          %s386 = smul.addr %s385, 2
          %s387 = scalar_lea.hbm %s7, %s386
          %s388 = sshll.u32 %s387, 4
          %s389 = int_to_ptr.hbm [resolvable:$true] %s388
          %s390 = sshll.u32 %s380, 4
          %s391 = int_to_ptr.vmem [resolvable:$true] %s390
          %396 = dma.hbm_to_vmem [thread:$0]  %s389, 256, %s391, %s377, 64, 64, 4
        $region48: #{tpu_custom_call.1} parent=35 // pred_fallthru
          _
      $region36: #{tpu_custom_call.1} parent=5 // pred_fallthru
        _
      %p397 = scmp.le.s32.totalorder 1, %s27
      %p398 = scmp.lt.s32.totalorder %s27, 3
      %p399 = pnand %p397, %p398
      %p400 = pneg %p399
      // Predicated region
      $region49: #{tpu_custom_call.1} parent=5 // pred_check
        _
      $region50: #{tpu_custom_call.1} parent=5 // pred_check_branch
        %402 = sbr.rel (%p399) target = $region52
      $region51: #{tpu_custom_call.1} parent=5 // pred_region
        %s403 = ssub.s32 %s27, 1
        // Predicated region
        $region53: #{tpu_custom_call.1} parent=51 // pred_check
          %p404 = pneg %p60
        $region54: #{tpu_custom_call.1} parent=51 // pred_check_branch
          %406 = sbr.rel (%p404) target = $region56
        $region55: #{tpu_custom_call.1} parent=51 // pred_region
          %408 = dma.done [#allocation5], 16
        $region56: #{tpu_custom_call.1} parent=51 // pred_fallthru
          _
        // Predicated region
        $region57: #{tpu_custom_call.1} parent=51 // pred_check
          %p409 = pneg %p81
        $region58: #{tpu_custom_call.1} parent=51 // pred_check_branch
          %411 = sbr.rel (%p409) target = $region60
        $region59: #{tpu_custom_call.1} parent=51 // pred_region
          %413 = dma.done [#allocation8], 16
        $region60: #{tpu_custom_call.1} parent=51 // pred_fallthru
          _
        // Predicated region
        $region61: #{tpu_custom_call.1} parent=51 // pred_check
          %p414 = pneg %p102
        $region62: #{tpu_custom_call.1} parent=51 // pred_check_branch
          %416 = sbr.rel (%p414) target = $region64
        $region63: #{tpu_custom_call.1} parent=51 // pred_region
          %418 = dma.done [#allocation6], 16
        $region64: #{tpu_custom_call.1} parent=51 // pred_fallthru
          _
        // Predicated region
        $region65: #{tpu_custom_call.1} parent=51 // pred_check
          %p419 = pneg %p123
        $region66: #{tpu_custom_call.1} parent=51 // pred_check_branch
          %421 = sbr.rel (%p419) target = $region68
        $region67: #{tpu_custom_call.1} parent=51 // pred_region
          %423 = dma.done [#allocation8], 64
        $region68: #{tpu_custom_call.1} parent=51 // pred_fallthru
          _
        // Predicated region
        $region69: #{tpu_custom_call.1} parent=51 // pred_check
          %p424 = pneg %p144
        $region70: #{tpu_custom_call.1} parent=51 // pred_check_branch
          %426 = sbr.rel (%p424) target = $region72
        $region71: #{tpu_custom_call.1} parent=51 // pred_region
          %428 = dma.done [#allocation12], 32
        $region72: #{tpu_custom_call.1} parent=51 // pred_fallthru
          _
        %s429 = sand.u32 %s159, 1
        %s430 = scalar_lea.sflag [#allocation3], %s429
        %s431 = sand.u32 %s159, 1
        %s432 = smul.addr %s431, 16
        %s433 = scalar_lea.vmem [#allocation13], %s432
        // Predicated region
        $region73: #{tpu_custom_call.1} parent=51 // pred_check
          %p434 = pneg %p172
        $region74: #{tpu_custom_call.1} parent=51 // pred_check_branch
          %436 = sbr.rel (%p434) target = $region76
        $region75: #{tpu_custom_call.1} parent=51 // pred_region
          %438 = dma.done %s430, 256
        $region76: #{tpu_custom_call.1} parent=51 // pred_fallthru
          _
        %s439 = sand.u32 %s32, 1
        %s440 = scalar_lea.sflag [#allocation15], %s439
        %s441 = sand.u32 %s187, 1
        %s442 = smul.addr %s441, 16
        %s443 = scalar_lea.vmem [#allocation14], %s442
        // Predicated region
        $region77: #{tpu_custom_call.1} parent=51 // pred_check
          %p444 = pneg %p200
        $region78: #{tpu_custom_call.1} parent=51 // pred_check_branch
          %446 = sbr.rel (%p444) target = $region80
        $region79: #{tpu_custom_call.1} parent=51 // pred_region
          %448 = dma.done %s440, 256
        $region80: #{tpu_custom_call.1} parent=51 // pred_fallthru
          _
        %s449 = sand.u32 %s32, 1
        %s450 = scalar_lea.sflag [#allocation15], %s449
        %s451 = sand.u32 %s215, 1
        %s452 = smul.addr %s451, 16
        %s453 = scalar_lea.vmem [#allocation16], %s452
        // Predicated region
        $region81: #{tpu_custom_call.1} parent=51 // pred_check
          %p454 = pneg %p228
        $region82: #{tpu_custom_call.1} parent=51 // pred_check_branch
          %456 = sbr.rel (%p454) target = $region84
        $region83: #{tpu_custom_call.1} parent=51 // pred_region
          %458 = dma.done %s450, 256
        $region84: #{tpu_custom_call.1} parent=51 // pred_fallthru
          _
        %459 = sfence
        %p460 = pneg %p60
        %p461 = pneg %p57
        %p462 = pneg %p81
        %p463 = pneg %p78
        %p464 = pneg %p102
        %p465 = pneg %p99
        %p466 = pneg %p123
        %p467 = pneg %p120
        %p468 = pneg %p144
        %p469 = pneg %p141
        %s470 = sand.u32 %s159, 1
        %s471 = scalar_lea.sflag [#allocation3], %s470
        %s472 = sand.u32 %s159, 1
        %s473 = smul.addr %s472, 16
        %s474 = scalar_lea.vmem [#allocation13], %s473
        %p475 = pneg %p172
        %p476 = pneg %p169
        %s477 = sand.u32 %s32, 1
        %s478 = scalar_lea.sflag [#allocation15], %s477
        %s479 = sand.u32 %s187, 1
        %s480 = smul.addr %s479, 16
        %s481 = scalar_lea.vmem [#allocation14], %s480
        %p482 = pneg %p200
        %p483 = pneg %p197
        %s484 = sand.u32 %s32, 1
        %s485 = scalar_lea.sflag [#allocation15], %s484
        %s486 = sand.u32 %s215, 1
        %s487 = smul.addr %s486, 16
        %s488 = scalar_lea.vmem [#allocation16], %s487
        %p489 = pneg %p228
        %p490 = pneg %p225
        %p491 = pneg %p256
        %p492 = pneg %p253
        %s493 = sand.u32 %s243, 1
        %s494 = scalar_lea.sflag [#allocation4], %s493
        %s495 = sand.u32 %s243, 1
        %s496 = smul.addr %s495, 16
        %s497 = scalar_lea.vmem [#allocation17], %s496
        %s498 = smul.u32 2, %s37
        %s499 = sld [smem:[#allocation2 + %s36]]
        %s500 = sld [smem:[#allocation7 + %s36]]
        %s501 = sld [smem:[#allocation9 + %s36]]
        %v502 = vld [vmem:[%s443] sm:$0xf]
        %s503 = scalar_lea.vmem %s443, 4 [#allocation14]
        %v504 = vld [vmem:[%s503] sm:$0xf]
        %s505 = scalar_lea.vmem %s443, 8 [#allocation14]
        %v506 = vld [vmem:[%s505] sm:$0xf]
        %s507 = scalar_lea.vmem %s443, 12 [#allocation14]
        %v508 = vld [vmem:[%s507] sm:$0xf]
        %v509 = vld [vmem:[%s453] sm:$0xf]
        %s510 = scalar_lea.vmem %s453, 4 [#allocation16]
        %v511 = vld [vmem:[%s510] sm:$0xf]
        %s512 = scalar_lea.vmem %s453, 8 [#allocation16]
        %v513 = vld [vmem:[%s512] sm:$0xf]
        %s514 = scalar_lea.vmem %s453, 12 [#allocation16]
        %v515 = vld [vmem:[%s514] sm:$0xf]
        %v516 = vld [vmem:[%s433] sm:$0xf]
        %v517 = vsub.f32 %v516, %v509
        %v518 = vmul.f32 %v517, %v502
        %v519 = vadd.f32 %v509, %v518
        %s520 = scalar_lea.vmem %s433, 4 [#allocation13]
        %v521 = vld [vmem:[%s520] sm:$0xf]
        %v522 = vsub.f32 %v521, %v511
        %v523 = vmul.f32 %v522, %v504
        %v524 = vadd.f32 %v511, %v523
        %s525 = scalar_lea.vmem %s433, 8 [#allocation13]
        %v526 = vld [vmem:[%s525] sm:$0xf]
        %v527 = vsub.f32 %v526, %v513
        %v528 = vmul.f32 %v527, %v506
        %v529 = vadd.f32 %v513, %v528
        %s530 = scalar_lea.vmem %s433, 12 [#allocation13]
        %v531 = vld [vmem:[%s530] sm:$0xf]
        %v532 = vsub.f32 %v531, %v515
        %v533 = vmul.f32 %v532, %v508
        %v534 = vadd.f32 %v515, %v533
        %s535 = sld [smem:[#allocation10]]
        %s536 = smul.f32 %s535, %s501
        %v537 = vstv %s536
        %v538 = vmul.f32 %v519, %v537
        %s539 = sld [smem:[#allocation10 + $0x1]]
        %s540 = smul.f32 %s539, %s501
        %v541 = vstv %s540
        %v542 = vmul.f32 %v524, %v541
        %v543 = vadd.f32 %v538, %v542
        %s544 = sld [smem:[#allocation10 + $0x2]]
        %s545 = smul.f32 %s544, %s501
        %v546 = vstv %s545
        %v547 = vmul.f32 %v529, %v546
        %v548 = vadd.f32 %v543, %v547
        %s549 = sld [smem:[#allocation10 + $0x3]]
        %s550 = smul.f32 %s549, %s501
        %v551 = vstv %s550
        %v552 = vmul.f32 %v534, %v551
        %v553 = vadd.f32 %v548, %v552
        %s554 = smul.u32 %s36, 128
        %s555 = sld [smem:[#allocation11 + %s554]]
        %v556 = vstv %s555
        %v557 = vadd.f32 %v553, %v556
        %v558 = vstv %s500
        %v559 = vmul.f32 %v557, %v558
        %v560 = vstv %s499
        %v561 = vmul.f32 %v519, %v560
        %v562 = vadd.f32 %v559, %v561
        %v563 = vsub.f32 %v562, %v509
        %v564 = vmul.f32 %v563, %v502
        %v565 = vadd.f32 %v509, %v564
        %v567 = vrot.slane %v565, 1
        %v568 = vrot.slane %v565, 2
        %v569 = vrot.slane %v565, 3
        %vm570 = vcmask 1040384
        %v571 = vsel %vm570, %v565, %v567
        %vm572 = vcmask 1042434
        %v573 = vsel %vm572, %v568, %v569
        %vm574 = vcmask 1041408
        %v575 = vsel %vm574, %v571, %v573
        %vm576 = vcmask 1041409
        %v577 = vsel %vm576, %v565, %v567
        %vm578 = vcmask 1043459
        %v579 = vsel %vm578, %v568, %v569
        %vm580 = vcmask 1042433
        %v581 = vsel %vm580, %v577, %v579
        %v582 = vrot.slane %v581, 1
        %v585 = vlaneseq
        %vm586 = vcmp.ge.s32.totalorder %v585, 0
        %vm587 = vcmp.lt.s32.totalorder %v585, 256
        %vm588 = vmand %vm586, %vm587
        %589 = vst.msk [vmem:[%s497] ss:$4 sm:$0x3] %vm588, %v575
        %s590 = scalar_lea.vmem %s497, 8 [#allocation17]
        %591 = vst.msk [vmem:[%s590] ss:$4 sm:$0x3] %vm588, %v582
        %s592 = sld [smem:[#allocation10 + $0x80]]
        %s593 = smul.f32 %s592, %s501
        %v594 = vstv %s593
        %v595 = vmul.f32 %v519, %v594
        %s596 = sld [smem:[#allocation10 + $0x81]]
        %s597 = smul.f32 %s596, %s501
        %v598 = vstv %s597
        %v599 = vmul.f32 %v524, %v598
        %v600 = vadd.f32 %v595, %v599
        %s601 = sld [smem:[#allocation10 + $0x82]]
        %s602 = smul.f32 %s601, %s501
        %v603 = vstv %s602
        %v604 = vmul.f32 %v529, %v603
        %v605 = vadd.f32 %v600, %v604
        %s606 = sld [smem:[#allocation10 + $0x83]]
        %s607 = smul.f32 %s606, %s501
        %v608 = vstv %s607
        %v609 = vmul.f32 %v534, %v608
        %v610 = vadd.f32 %v605, %v609
        %s611 = sadd.s32 %s554, 1
        %s612 = sld [smem:[#allocation11 + %s611]]
        %v613 = vstv %s612
        %v614 = vadd.f32 %v610, %v613
        %v615 = vmul.f32 %v614, %v558
        %v616 = vmul.f32 %v524, %v560
        %v617 = vadd.f32 %v615, %v616
        %v618 = vsub.f32 %v617, %v511
        %v619 = vmul.f32 %v618, %v504
        %v620 = vadd.f32 %v511, %v619
        %v622 = vrot.slane %v620, 1
        %v623 = vrot.slane %v620, 2
        %v624 = vrot.slane %v620, 3
        %v625 = vsel %vm570, %v620, %v622
        %v626 = vsel %vm572, %v623, %v624
        %v627 = vsel %vm574, %v625, %v626
        %v628 = vsel %vm576, %v620, %v622
        %v629 = vsel %vm578, %v623, %v624
        %v630 = vsel %vm580, %v628, %v629
        %v631 = vrot.slane %v630, 1
        %s634 = scalar_lea.vmem %s497, 1 [#allocation17]
        %635 = vst.msk [vmem:[%s634] ss:$4 sm:$0x3] %vm588, %v627
        %s636 = scalar_lea.vmem %s497, 9 [#allocation17]
        %637 = vst.msk [vmem:[%s636] ss:$4 sm:$0x3] %vm588, %v631
        %s638 = sld [smem:[#allocation10 + $0x100]]
        %s639 = smul.f32 %s638, %s501
        %v640 = vstv %s639
        %v641 = vmul.f32 %v519, %v640
        %s642 = sld [smem:[#allocation10 + $0x101]]
        %s643 = smul.f32 %s642, %s501
        %v644 = vstv %s643
        %v645 = vmul.f32 %v524, %v644
        %v646 = vadd.f32 %v641, %v645
        %s647 = sld [smem:[#allocation10 + $0x102]]
        %s648 = smul.f32 %s647, %s501
        %v649 = vstv %s648
        %v650 = vmul.f32 %v529, %v649
        %v651 = vadd.f32 %v646, %v650
        %s652 = sld [smem:[#allocation10 + $0x103]]
        %s653 = smul.f32 %s652, %s501
        %v654 = vstv %s653
        %v655 = vmul.f32 %v534, %v654
        %v656 = vadd.f32 %v651, %v655
        %s657 = sadd.s32 %s554, 2
        %s658 = sld [smem:[#allocation11 + %s657]]
        %v659 = vstv %s658
        %v660 = vadd.f32 %v656, %v659
        %v661 = vmul.f32 %v660, %v558
        %v662 = vmul.f32 %v529, %v560
        %v663 = vadd.f32 %v661, %v662
        %v664 = vsub.f32 %v663, %v513
        %v665 = vmul.f32 %v664, %v506
        %v666 = vadd.f32 %v513, %v665
        %v668 = vrot.slane %v666, 1
        %v669 = vrot.slane %v666, 2
        %v670 = vrot.slane %v666, 3
        %v671 = vsel %vm570, %v666, %v668
        %v672 = vsel %vm572, %v669, %v670
        %v673 = vsel %vm574, %v671, %v672
        %v674 = vsel %vm576, %v666, %v668
        %v675 = vsel %vm578, %v669, %v670
        %v676 = vsel %vm580, %v674, %v675
        %v677 = vrot.slane %v676, 1
        %s680 = scalar_lea.vmem %s497, 2 [#allocation17]
        %681 = vst.msk [vmem:[%s680] ss:$4 sm:$0x3] %vm588, %v673
        %s682 = scalar_lea.vmem %s497, 10 [#allocation17]
        %683 = vst.msk [vmem:[%s682] ss:$4 sm:$0x3] %vm588, %v677
        %s684 = sld [smem:[#allocation10 + $0x180]]
        %s685 = smul.f32 %s684, %s501
        %v686 = vstv %s685
        %v687 = vmul.f32 %v519, %v686
        %s688 = sld [smem:[#allocation10 + $0x181]]
        %s689 = smul.f32 %s688, %s501
        %v690 = vstv %s689
        %v691 = vmul.f32 %v524, %v690
        %v692 = vadd.f32 %v687, %v691
        %s693 = sld [smem:[#allocation10 + $0x182]]
        %s694 = smul.f32 %s693, %s501
        %v695 = vstv %s694
        %v696 = vmul.f32 %v529, %v695
        %v697 = vadd.f32 %v692, %v696
        %s698 = sld [smem:[#allocation10 + $0x183]]
        %s699 = smul.f32 %s698, %s501
        %v700 = vstv %s699
        %v701 = vmul.f32 %v534, %v700
        %v702 = vadd.f32 %v697, %v701
        %s703 = sadd.s32 %s554, 3
        %s704 = sld [smem:[#allocation11 + %s703]]
        %v705 = vstv %s704
        %v706 = vadd.f32 %v702, %v705
        %v707 = vmul.f32 %v706, %v558
        %v708 = vmul.f32 %v534, %v560
        %v709 = vadd.f32 %v707, %v708
        %v710 = vsub.f32 %v709, %v515
        %v711 = vmul.f32 %v710, %v508
        %v712 = vadd.f32 %v515, %v711
        %v714 = vrot.slane %v712, 1
        %v715 = vrot.slane %v712, 2
        %v716 = vrot.slane %v712, 3
        %v717 = vsel %vm570, %v712, %v714
        %v718 = vsel %vm572, %v715, %v716
        %v719 = vsel %vm574, %v717, %v718
        %v720 = vsel %vm576, %v712, %v714
        %v721 = vsel %vm578, %v715, %v716
        %v722 = vsel %vm580, %v720, %v721
        %v723 = vrot.slane %v722, 1
        %s726 = scalar_lea.vmem %s497, 3 [#allocation17]
        %727 = vst.msk [vmem:[%s726] ss:$4 sm:$0x3] %vm588, %v719
        %s728 = scalar_lea.vmem %s497, 11 [#allocation17]
        %729 = vst.msk [vmem:[%s728] ss:$4 sm:$0x3] %vm588, %v723
        %s730 = sand.u32 %s243, 1
        %s731 = scalar_lea.sflag [#allocation4], %s730
        %s732 = sand.u32 %s243, 1
        %s733 = smul.addr %s732, 16
        %s734 = scalar_lea.vmem [#allocation17], %s733
        // Predicated region
        $region85: #{tpu_custom_call.1} parent=51 // pred_check
          %p735 = pneg %p253
        $region86: #{tpu_custom_call.1} parent=51 // pred_check_branch
          %737 = sbr.rel (%p735) target = $region88
        $region87: #{tpu_custom_call.1} parent=51 // pred_region
          %s738 = smul.u32 2, %s37
          %740 = vsyncadd %s731, 0
          %s741 = smul.addr %s738, 2
          %s742 = smul.addr %s36, 4
          %s743 = sadd.s32 %s741, %s742
          %s744 = smul.addr %s743, 4
          %s745 = scalar_lea.hbm %s8, %s744
          %s746 = sshll.u32 %s734, 4
          %s747 = int_to_ptr.vmem [resolvable:$true] %s746
          %s748 = sshll.u32 %s745, 4
          %s749 = int_to_ptr.hbm [resolvable:$true] %s748
          %754 = dma.vmem_to_hbm [thread:$0]  %s747, 256, %s749, %s731, 128, 128, 8
        $region88: #{tpu_custom_call.1} parent=51 // pred_fallthru
          _
      $region52: #{tpu_custom_call.1} parent=5 // pred_fallthru
        _
      %p755 = scmp.le.s32.totalorder 2, %s27
      // Predicated region
      $region89: #{tpu_custom_call.1} parent=5 // pred_check
        %p756 = pneg %p755
      $region90: #{tpu_custom_call.1} parent=5 // pred_check_branch
        %758 = sbr.rel (%p756) target = $region92
      $region91: #{tpu_custom_call.1} parent=5 // pred_region
        %s759 = ssub.s32 %s27, 2
        // Predicated region
        $region93: #{tpu_custom_call.1} parent=91 // pred_check
          %p760 = pneg %p259
        $region94: #{tpu_custom_call.1} parent=91 // pred_check_branch
          %762 = sbr.rel (%p760) target = $region96
        $region95: #{tpu_custom_call.1} parent=91 // pred_region
          %s763 = sand.u32 %s244, 1
          %s764 = scalar_lea.sflag [#allocation4], %s763
          %s765 = sand.u32 %s244, 1
          %s766 = smul.addr %s765, 16
          %s767 = scalar_lea.vmem [#allocation17], %s766
          %769 = dma.done %s764, 256
        $region96: #{tpu_custom_call.1} parent=91 // pred_fallthru
          _
      $region92: #{tpu_custom_call.1} parent=5 // pred_fallthru
        _
    $region6: #{tpu_custom_call.1} parent=1 // loop_footer
      %s31 = sadd.s32 1, %s27
    $region7: #{tpu_custom_call.1} parent=1 // loop_footer_branch
      %26 = sbr.rel target = $region3
    $region8: #{tpu_custom_call.1} parent=1 // loop_exit
      _
    %770 = vsyncpa [#allocation3], 1
    %s771 = scalar_lea.sflag [#allocation3], 1
    %772 = vsyncpa %s771, 1
    %773 = vsyncpa [#allocation15], 1
    %s774 = scalar_lea.sflag [#allocation15], 1
    %775 = vsyncpa %s774, 1
    %776 = vsyncpa [#allocation4], 1
    %s777 = scalar_lea.sflag [#allocation4], 1
    %778 = vsyncpa %s777, 1
    %779 = vsyncpa [#allocation5], 1
    %s780 = scalar_lea.sflag [#allocation5], 1
    %781 = vsyncpa %s780, 1
    %782 = vsyncpa [#allocation8], 1
    %783 = vsyncpa [#allocation6], 1
    %s784 = scalar_lea.sflag [#allocation6], 1
    %785 = vsyncpa %s784, 1
    %786 = vsyncpa [#allocation12], 1

</llo_original>
